<compile_context>
chip_gen: v6e
topology: v6e:2x2x1
jax: 0.10.0
libtpu: 0.0.40
codegen_flags: <defaults>
</compile_context>

<pallas_src>
import functools

import jax
import jax.numpy as jnp
from jax.experimental import pallas as pl
from jax.experimental.pallas import tpu as pltpu


def _neutral_min(dtype):
    """Identity element for `max` in the given dtype."""
    if jnp.issubdtype(dtype, jnp.floating):
        return jnp.array(-jnp.inf, dtype)
    if jnp.issubdtype(dtype, jnp.integer):
        return jnp.array(jnp.iinfo(dtype).min, dtype)
    return jnp.array(False, dtype)  # bool


def _global_max_pool_kernel(x_ref, o_ref, *, n_total, tn, need_mask):
    """x_ref: (tb, tn, tk) input tile; o_ref: (tb, tk) VMEM-resident accumulator.

    The output BlockSpec returns the same block index for every step along the
    reduction (N) grid axis, so o_ref stays resident in VMEM and acts as a
    running-max accumulator.  Step 0 writes the tile max directly (no sentinel
    init needed, correct for integer dtypes too).
    """
    n_step = pl.program_id(2)
    x = x_ref[...]                                    # (tb, tn, tk)

    if need_mask:
        # Final N tile may extend past the array; padded rows hold garbage.
        n_valid = n_total - n_step * tn               # >= tn except last step
        row = jax.lax.broadcasted_iota(jnp.int32, x.shape, dimension=1)
        x = jnp.where(row < n_valid, x, _neutral_min(x.dtype))

    tile_max = jnp.max(x, axis=1)                     # (tb, tk)

    @pl.when(n_step == 0)
    def _():
        o_ref[...] = tile_max

    @pl.when(n_step > 0)
    def _():
        o_ref[...] = jnp.maximum(o_ref[...], tile_max)


def _round_up(x, m):
    return -(-x // m) * m


def _round_down(x, m):
    return (x // m) * m


def _choose_tiles(B, N, K, itemsize, budget):
    """Pick (tb, tn, tk). Tiles need not divide the dims (edge tiles masked/clipped)."""
    # sublane packing granularity: f32 -> 8, bf16 -> 16, int8/fp8 -> 32
    sub = {4: 8, 2: 16, 1: 32}.get(itemsize, 8)

    # Lane (K) axis: keep full K (lane-dense, single block) unless K is very
    # large, in which case use a 128-aligned chunk so tn is not forced tiny.
    lane_cap = 4096
    tk = K if K <= lane_cap else 2048

    # Reduction (N) axis: biggest sublane-aligned row count within the budget.
    max_rows = max(sub, _round_down(budget // (tk * itemsize), sub))
    tn = min(_round_up(N, sub), max_rows)

    # Batch axis: only widen when a single step already covers all of N, to
    # amortize fixed per-grid-step overhead on small problems.
    tb = 1
    if tn >= N:
        slack = max(1, budget // (tn * tk * itemsize))
        tb = int(min(B, slack))
    return tb, tn, tk


def global_max_pool(x: jax.Array, *, tb: int | None = None,
                    tn: int | None = None, tk: int | None = None,
                    tile_budget_bytes: int = 8 * 1024 * 1024) -> jax.Array:
    """GlobalPool forward: (B, N, K) -> (B, K), max over the N (points) axis."""
    B, N, K = x.shape
    itemsize = jnp.dtype(x.dtype).itemsize

    a_tb, a_tn, a_tk = _choose_tiles(B, N, K, itemsize, tile_budget_bytes)
    tb = a_tb if tb is None else tb
    tn = a_tn if tn is None else tn
    tk = a_tk if tk is None else tk

    grid = (pl.cdiv(B, tb), pl.cdiv(K, tk), pl.cdiv(N, tn))  # reduction last
    need_mask = (N % tn) != 0

    kernel = functools.partial(_global_max_pool_kernel,
                               n_total=N, tn=tn, need_mask=need_mask)

    # Double-buffered input + output tiles + margin; clamp for v7x's 64 MiB.
    needed = 2 * tb * tn * tk * itemsize + 2 * tb * tk * itemsize + (2 << 20)
    vmem_limit = int(min(64 * 1024 * 1024, max(32 * 1024 * 1024, needed)))

    return pl.pallas_call(
        kernel,
        out_shape=jax.ShapeDtypeStruct((B, K), x.dtype),
        grid=grid,
        in_specs=[pl.BlockSpec((tb, tn, tk), lambda b, k, n: (b, n, k))],
        out_specs=pl.BlockSpec((tb, tk), lambda b, k, n: (b, k)),
        compiler_params=pltpu.CompilerParams(
            dimension_semantics=("parallel", "parallel", "arbitrary"),
            vmem_limit_bytes=vmem_limit,
        ),
    )(x)


if __name__ == "__main__":
    key = jax.random.PRNGKey(0)
    B, N, K = 2, 16, 32  # small BxNxK, matching the PyTorch module's layout
    x = jax.random.normal(key, (B, N, K), dtype=jnp.float32)
    y_ref = jnp.max(x, axis=1)

    # Auto-tiled path (whole reduction fits in one tile at this size).
    y = jax.block_until_ready(global_max_pool(x))
    assert y.shape == (B, K)
    assert jnp.allclose(y, y_ref), "mismatch vs reference (auto tiles)"

    # Force a small reduction tile to exercise the multi-step accumulator path.
    y2 = jax.block_until_ready(global_max_pool(x, tn=8))
    assert jnp.allclose(y2, y_ref), "mismatch vs reference (tn=8)"

    # Non-divisible N exercises the masked (padded) final reduction step.
    x3 = jax.random.normal(jax.random.PRNGKey(1), (2, 13, 32), jnp.float32)
    y3 = jax.block_until_ready(global_max_pool(x3, tn=8))
    assert jnp.allclose(y3, jnp.max(x3, axis=1)), "mismatch vs reference (N=13)"

    # Integer dtype (masking uses iinfo.min; step-0 write avoids sentinels).
    xi = jax.random.randint(key, (B, N, K), minval=-100, maxval=100,
                            dtype=jnp.int32)
    yi = jax.block_until_ready(global_max_pool(xi, tn=8))
    assert jnp.array_equal(yi, jnp.max(xi, axis=1)), "mismatch vs reference (int32)"

    print("KERNEL_OK")
</pallas_src>

<mosaic_0001>
module attributes {stable_mosaic.version = 11 : i64} {
  func.func @_global_max_pool_kernel(%arg0: i32, %arg1: i32, %arg2: i32, %arg3: memref<2x16x32xf32, #tpu.memory_space<vmem>>, %arg4: memref<2x32xf32, #tpu.memory_space<vmem>>) attributes {dimension_semantics = [#tpu.dimension_semantics<parallel>, #tpu.dimension_semantics<parallel>, #tpu.dimension_semantics<arbitrary>], iteration_bounds = array<i64: 1, 1, 1>, scalar_prefetch = 0 : i64, scratch_operands = 0 : i64, tpu.core_type = #tpu.core_type<tc>, window_params = [{transform_indices = @transform_0, window_bounds = array<i64: 2, 16, 32>}, {transform_indices = @transform_1, window_bounds = array<i64: 2, 32>}]} {
    %c0 = arith.constant 0 : index
    %c0_0 = arith.constant 0 : index
    %c0_1 = arith.constant 0 : index
    %0 = vector.load %arg3[%c0, %c0_0, %c0_1] : memref<2x16x32xf32, #tpu.memory_space<vmem>>, vector<2x16x32xf32>
    %cst = arith.constant dense<0xFF800000> : vector<2x32xf32>
    %1 = vector.multi_reduction <maximumf>, %0, %cst [1] : vector<2x16x32xf32> to vector<2x32xf32>
    %c0_i32 = arith.constant 0 : i32
    %2 = arith.cmpi eq, %arg2, %c0_i32 : i32
    %3 = arith.extui %2 : i1 to i32
    %c0_i32_2 = arith.constant 0 : i32
    %4 = arith.cmpi ne, %3, %c0_i32_2 : i32
    scf.if %4 {
      %c0_5 = arith.constant 0 : index
      %c0_6 = arith.constant 0 : index
      %8 = vector.load %arg4[%c0_5, %c0_6] : memref<2x32xf32, #tpu.memory_space<vmem>>, vector<2x32xf32>
      tpu.vector_store %arg4[%c0_5, %c0_6], %1 {strides = array<i32>} : memref<2x32xf32, #tpu.memory_space<vmem>>, vector<2x32xf32>,
    } else {
    }
    %c0_i32_3 = arith.constant 0 : i32
    %5 = arith.cmpi sgt, %arg2, %c0_i32_3 : i32
    %6 = arith.extui %5 : i1 to i32
    %c0_i32_4 = arith.constant 0 : i32
    %7 = arith.cmpi ne, %6, %c0_i32_4 : i32
    scf.if %7 {
      %c0_5 = arith.constant 0 : index
      %c0_6 = arith.constant 0 : index
      %8 = vector.load %arg4[%c0_5, %c0_6] : memref<2x32xf32, #tpu.memory_space<vmem>>, vector<2x32xf32>
      %9 = arith.maximumf %8, %1 : vector<2x32xf32>
      %c0_7 = arith.constant 0 : index
      %c0_8 = arith.constant 0 : index
      %10 = vector.load %arg4[%c0_7, %c0_8] : memref<2x32xf32, #tpu.memory_space<vmem>>, vector<2x32xf32>
      tpu.vector_store %arg4[%c0_7, %c0_8], %9 {strides = array<i32>} : memref<2x32xf32, #tpu.memory_space<vmem>>, vector<2x32xf32>,
    } else {
    }
    return
  }
  func.func @transform_0(%arg0: i32, %arg1: i32, %arg2: i32) -> (i32, i32, i32) {
    %c0_i32 = arith.constant 0 : i32
    return %arg0, %arg2, %arg1 : i32, i32, i32
  }
  func.func @transform_1(%arg0: i32, %arg1: i32, %arg2: i32) -> (i32, i32) {
    %c0_i32 = arith.constant 0 : i32
    return %arg0, %arg1 : i32, i32
  }
}

</mosaic_0001>

<llo_original>
// kernel: tpu_custom_call.1
$region0: #{tpu_custom_call.1}
  #allocation0 [shape = 'u32[]', space=smem, size = 0x4, offset = 0x4, fixed_abs, tag = 'smem constant byte address 0x4 - core index']
  #allocation1 [shape = 'u32[144,128]{1,0:T(1,128)}', space=vmem, size = 0x12000, scoped, tag = 'internal scratch']
  %s0 = inlined_call_operand.hbm [shape: f32[2,16,32], index: 0, kind: input, shape index: {}]
  %s1 = inlined_call_operand.hbm [shape: f32[2,32], index: 1, kind: output, shape index: {}]
  %s2 = sld [smem:[#allocation0]]
  $region26: #{tpu_custom_call.1} parent=0
    _
  %s4 = ssub.s32 1, %s2
  %s5 = scalar_select 0, %s4, %s2
  $region1: #{tpu_custom_call.1} parent=0
    #allocation2 [shape = 'u8[16384]{0}', space=vmem, size = 0x4000, scoped, tag = 'input window, operand 0, single buffered']
    #allocation3 [shape = 's32[1]{0}', space=sflag, size = 0x4, scoped, tag = 'scoped memory for tpu_custom_call.1']
    #allocation4 [shape = 's32[1]{0}', space=sflag, size = 0x4, scoped, tag = 'scoped memory for tpu_custom_call.1']
    #allocation5 [shape = 'u8[1024]{0}', space=vmem, size = 0x400, scoped, tag = 'output window, operand 0, single buffered']
    %6 = vsyncpa [#allocation3], 0
    %7 = vsyncpa [#allocation4], 0
    // Predicated region
    $region2: #{tpu_custom_call.1} parent=1 // pred_check
      _
    $region3: #{tpu_custom_call.1} parent=1 // pred_check_branch
      %9 = sbr.rel (0) target = $region5
    $region4: #{tpu_custom_call.1} parent=1 // pred_region
      %s11 = ssub.s32 512, 512
      %12 = vsyncadd [#allocation3], %s11
      %s13 = sshll.u32 [#allocation2], 4
      %s14 = int_to_ptr.vmem [resolvable:$true] %s13
      %19 = dma.hbm_to_vmem [thread:$0]  %s0, 512, %s14, [#allocation3], 128, 128, 8
    $region5: #{tpu_custom_call.1} parent=1 // pred_fallthru
      _
    // Predicated region
    $region6: #{tpu_custom_call.1} parent=1 // pred_check
      _
    $region7: #{tpu_custom_call.1} parent=1 // pred_check_branch
      %21 = sbr.rel (0) target = $region9
    $region8: #{tpu_custom_call.1} parent=1 // pred_region
      %22 = dma.done [#allocation3], 512
    $region9: #{tpu_custom_call.1} parent=1 // pred_fallthru
      _
    %v23 = vld [vmem:[#allocation2] sm:$0xff]
    %v24 = vld [vmem:[#allocation2 + $0x8] sm:$0xff]
    %v25 = vld [vmem:[#allocation2 + $0x10] sm:$0xff]
    %v26 = vld [vmem:[#allocation2 + $0x18] sm:$0xff]
    %vm27 = vcmask 261120
    %v28 = vsel %vm27, %v23, -inf
    %v29 = vsel %vm27, %v24, -inf
    %v30 = vmax.f32 %v28, %v29
    %v31 = vrot.slane %v30, 4
    %v32 = vmax.f32 %v30, %v31
    %v33 = vrot.slane %v32, 2
    %v34 = vmax.f32 %v32, %v33
    %v35 = vrot.slane %v34, 1
    %v36 = vmax.f32 %v34, %v35
    %v37 = vsel %vm27, %v25, -inf
    %v38 = vsel %vm27, %v26, -inf
    %v39 = vmax.f32 %v37, %v38
    %v40 = vrot.slane %v39, 4
    %v41 = vmax.f32 %v39, %v40
    %v42 = vrot.slane %v41, 2
    %v43 = vmax.f32 %v41, %v42
    %v44 = vrot.slane %v43, 1
    %v45 = vmax.f32 %v43, %v44
    %p46 = scmp.eq.s32.totalorder 0, 0
    // Predicated region
    $region10: #{tpu_custom_call.1} parent=1 // pred_check
      %p47 = pneg %p46
    $region11: #{tpu_custom_call.1} parent=1 // pred_check_branch
      %49 = sbr.rel (%p47) target = $region13
    $region12: #{tpu_custom_call.1} parent=1 // pred_region
      %vm52 = vcmask 1041409
      %v53 = vsel %vm52, %v45, %v36
      %vm55 = vcmask 254976
      %56 = vst.msk [vmem:[#allocation5] sm:$0x3] %vm55, %v53
    $region13: #{tpu_custom_call.1} parent=1 // pred_fallthru
      _
    %p57 = scmp.gt.s32.totalorder 0, 0
    // Predicated region
    $region14: #{tpu_custom_call.1} parent=1 // pred_check
      %p58 = pneg %p57
    $region15: #{tpu_custom_call.1} parent=1 // pred_check_branch
      %60 = sbr.rel (%p58) target = $region17
    $region16: #{tpu_custom_call.1} parent=1 // pred_region
      %v61 = vld [vmem:[#allocation5] sm:$0x3]
      %vm64 = vcmask 1041409
      %v65 = vsel %vm64, %v45, %v36
      %v67 = vmax.f32 %v61, %v65
      %vm68 = vcmask 254976
      %69 = vst.msk [vmem:[#allocation5] sm:$0x3] %vm68, %v67
    $region17: #{tpu_custom_call.1} parent=1 // pred_fallthru
      _
    // Predicated region
    $region18: #{tpu_custom_call.1} parent=1 // pred_check
      _
    $region19: #{tpu_custom_call.1} parent=1 // pred_check_branch
      %71 = sbr.rel (0) target = $region21
    $region20: #{tpu_custom_call.1} parent=1 // pred_region
      %s73 = ssub.s32 32, 32
      %74 = vsyncadd [#allocation4], %s73
      %s76 = sshll.u32 [#allocation5], 4
      %s77 = int_to_ptr.vmem [resolvable:$true] %s76
      %79 = dma.vmem_to_hbm [thread:$0]  %s77, 32, %s1, [#allocation4]
    $region21: #{tpu_custom_call.1} parent=1 // pred_fallthru
      _
    // Predicated region
    $region22: #{tpu_custom_call.1} parent=1 // pred_check
      _
    $region23: #{tpu_custom_call.1} parent=1 // pred_check_branch
      %81 = sbr.rel (0) target = $region25
    $region24: #{tpu_custom_call.1} parent=1 // pred_region
      %82 = dma.done [#allocation4], 32
    $region25: #{tpu_custom_call.1} parent=1 // pred_fallthru
      _
    %83 = vsyncpa [#allocation3], 1
    %84 = vsyncpa [#allocation4], 1

</llo_original>
